<compile_context>
chip_gen: v7x
topology: tpu7x:2x2x1
jax: 0.10.0
libtpu: 0.0.40
codegen_flags: <defaults>
</compile_context>

<pallas_src>
import functools

import jax
import jax.numpy as jnp
from jax import lax
from jax.experimental import pallas as pl
from jax.experimental.pallas import tpu as pltpu


def _round_up(x, m):
    return ((x + m - 1) // m) * m


def _linear_kernel(x_ref, w_ref, b_ref, o_ref, acc_ref):
    """Computes one (tm, tn) output tile, accumulating over the K grid axis.

    x_ref:   (tm, tk)  activation tile
    w_ref:   (tn, tk)  weight tile in PyTorch (out, in) layout (no HBM transpose)
    b_ref:   (1,  tn)  bias tile (float32)
    o_ref:   (tm, tn)  output tile
    acc_ref: (tm, tn)  float32 VMEM accumulator scratch
    """
    k = pl.program_id(2)

    @pl.when(k == 0)
    def _():
        acc_ref[...] = jnp.zeros_like(acc_ref)

    # Contract x's last dim with w's last dim (w kept as (N, K)).
    acc_ref[...] += lax.dot_general(
        x_ref[...],
        w_ref[...],
        dimension_numbers=(((1,), (1,)), ((), ())),
        preferred_element_type=jnp.float32,
    )

    @pl.when(k == pl.num_programs(2) - 1)
    def _():
        o_ref[...] = (acc_ref[...] + b_ref[...]).astype(o_ref.dtype)


@functools.partial(jax.jit, static_argnames=("tm", "tn", "tk", "compute_dtype"))
def pallas_linear(x, weight, bias=None, *, tm=256, tn=256, tk=512,
                  compute_dtype=jnp.bfloat16):
    """Equivalent of torch.nn.Linear(in_dim, out_dim)(x).

    x:      (..., in_dim)
    weight: (out_dim, in_dim)   (PyTorch convention; NOT transposed in HBM)
    bias:   (out_dim,) or None
    compute_dtype: dtype fed to the MXU (default bf16; accumulation is f32).
                   Pass None to keep the input dtype (e.g. pure f32).
    """
    *lead, in_dim = x.shape
    out_dim = weight.shape[0]
    out_dtype = x.dtype

    m = 1
    for d in lead:
        m *= d

    x2 = x.reshape(m, in_dim)

    # bf16 MXU operands (f32 accumulation stays inside the kernel).
    if compute_dtype is not None:
        x2 = x2.astype(compute_dtype)
        w = weight.astype(compute_dtype)
    else:
        w = weight

    # --- tile sizing -------------------------------------------------------
    # M: no activation padding; grid uses cdiv and the ragged last block's
    #    extra rows are simply never read back.
    tm_eff = min(tm, _round_up(m, 8))

    # N: lane-dense output -- pad out_dim up to a multiple of 128 (and of tn).
    tn_eff = min(tn, _round_up(out_dim, 128))
    n_pad = _round_up(out_dim, tn_eff)

    # K: streamed reduction axis. Only pad K when it actually gets tiled.
    if in_dim <= tk:
        tk_eff = in_dim
        k_pad = in_dim
    else:
        tk_eff = tk
        k_pad = _round_up(in_dim, tk_eff)

    if k_pad != in_dim:
        x2 = jnp.pad(x2, ((0, 0), (0, k_pad - in_dim)))
        w = jnp.pad(w, ((0, 0), (0, k_pad - in_dim)))
    if n_pad != out_dim:
        w = jnp.pad(w, ((0, n_pad - out_dim), (0, 0)))

    if bias is not None:
        b2 = bias.astype(jnp.float32).reshape(1, out_dim)
    else:
        b2 = jnp.zeros((1, out_dim), dtype=jnp.float32)
    if n_pad != out_dim:
        b2 = jnp.pad(b2, ((0, 0), (0, n_pad - out_dim)))

    grid = (pl.cdiv(m, tm_eff), n_pad // tn_eff, k_pad // tk_eff)

    cost = pl.CostEstimate(
        flops=2 * m * n_pad * k_pad,
        transcendentals=0,
        bytes_accessed=(
            x2.size * x2.dtype.itemsize
            + w.size * w.dtype.itemsize
            + b2.size * b2.dtype.itemsize
            + m * n_pad * jnp.dtype(out_dtype).itemsize
        ),
    )

    out = pl.pallas_call(
        _linear_kernel,
        out_shape=jax.ShapeDtypeStruct((m, n_pad), out_dtype),
        grid=grid,
        in_specs=[
            pl.BlockSpec((tm_eff, tk_eff), lambda i, j, k: (i, k)),  # x
            pl.BlockSpec((tn_eff, tk_eff), lambda i, j, k: (j, k)),  # W (N, K)
            pl.BlockSpec((1, tn_eff), lambda i, j, k: (0, j)),       # bias
        ],
        out_specs=pl.BlockSpec((tm_eff, tn_eff), lambda i, j, k: (i, j)),
        scratch_shapes=[pltpu.VMEM((tm_eff, tn_eff), jnp.float32)],
        compiler_params=pltpu.CompilerParams(
            dimension_semantics=("parallel", "parallel", "arbitrary"),
            vmem_limit_bytes=64 * 1024 * 1024,
        ),
        cost_estimate=cost,
    )(x2, w, b2)

    out = out[:, :out_dim]
    return out.reshape(*lead, out_dim)


def init_linear_params(key, in_dim, out_dim, bias=True, dtype=jnp.float32):
    """Deterministic init matching the PyTorch module's __init__."""
    w = jax.random.normal(key, (out_dim, in_dim), dtype=dtype) * 0.02
    b = jnp.zeros((out_dim,), dtype=dtype) if bias else None
    return w, b


if __name__ == "__main__":
    key = jax.random.PRNGKey(0)
    k_x, k_w = jax.random.split(key)

    batch, seq, in_dim, out_dim = 2, 8, 32, 64
    x = jax.random.normal(k_x, (batch, seq, in_dim), dtype=jnp.float32)
    weight, bias = init_linear_params(k_w, in_dim, out_dim, bias=True)

    # Plain-JAX f32 reference.
    y_ref = x @ weight.T + bias

    # f32 MXU operands: matches the f32 PyTorch reference tightly.
    y_f32 = pallas_linear(x, weight, bias, compute_dtype=None)
    y_f32 = jax.block_until_ready(y_f32)
    assert y_f32.shape == (batch, seq, out_dim)
    assert jnp.allclose(y_f32, y_ref, atol=1e-5, rtol=1e-5)

    # Default path: bf16 MXU operands with f32 accumulation (recommended on
    # v5e/v6e/v7x). Accumulation stays f32, so error vs the f32 reference is
    # bounded; use a correspondingly looser tolerance.
    y_bf16 = pallas_linear(x, weight, bias)
    y_bf16 = jax.block_until_ready(y_bf16)
    assert y_bf16.shape == (batch, seq, out_dim)
    assert jnp.allclose(y_bf16, y_ref, atol=1e-2, rtol=5e-2)

    print("KERNEL_OK")
</pallas_src>

<mosaic_0001>
module attributes {stable_mosaic.version = 11 : i64} {
  func.func @_linear_kernel(%arg0: i32, %arg1: i32, %arg2: i32, %arg3: memref<16x32xf32, #tpu.memory_space<vmem>>, %arg4: memref<128x32xf32, #tpu.memory_space<vmem>>, %arg5: memref<1x128xf32, #tpu.memory_space<vmem>>, %arg6: memref<16x128xf32, #tpu.memory_space<vmem>>, %arg7: memref<16x128xf32, #tpu.memory_space<vmem>>) attributes {dimension_semantics = [#tpu.dimension_semantics<parallel>, #tpu.dimension_semantics<parallel>, #tpu.dimension_semantics<arbitrary>], iteration_bounds = array<i64: 1, 1, 1>, scalar_prefetch = 0 : i64, scratch_operands = 1 : i64, tpu.core_type = #tpu.core_type<tc>, window_params = [{transform_indices = @transform_0, window_bounds = array<i64: 16, 32>}, {transform_indices = @transform_1, window_bounds = array<i64: 128, 32>}, {transform_indices = @transform_2, window_bounds = array<i64: 1, 128>}, {transform_indices = @transform_3, window_bounds = array<i64: 16, 128>}]} {
    %c0_i32 = arith.constant 0 : i32
    %0 = arith.cmpi eq, %arg2, %c0_i32 : i32
    %1 = arith.extui %0 : i1 to i32
    %c0_i32_0 = arith.constant 0 : i32
    %2 = arith.cmpi ne, %1, %c0_i32_0 : i32
    scf.if %2 {
      %cst_10 = arith.constant 0.000000e+00 : f32
      %12 = vector.broadcast %cst_10 : f32 to vector<16x128xf32>
      %c0_11 = arith.constant 0 : index
      %c0_12 = arith.constant 0 : index
      %13 = vector.load %arg7[%c0_11, %c0_12] : memref<16x128xf32, #tpu.memory_space<vmem>>, vector<16x128xf32>
      tpu.vector_store %arg7[%c0_11, %c0_12], %12 {strides = array<i32>} : memref<16x128xf32, #tpu.memory_space<vmem>>, vector<16x128xf32>,
    } else {
    }
    %c0 = arith.constant 0 : index
    %c0_1 = arith.constant 0 : index
    %3 = vector.load %arg7[%c0, %c0_1] : memref<16x128xf32, #tpu.memory_space<vmem>>, vector<16x128xf32>
    %c0_2 = arith.constant 0 : index
    %c0_3 = arith.constant 0 : index
    %4 = vector.load %arg3[%c0_2, %c0_3] : memref<16x32xf32, #tpu.memory_space<vmem>>, vector<16x32xf32>
    %c0_4 = arith.constant 0 : index
    %c0_5 = arith.constant 0 : index
    %5 = vector.load %arg4[%c0_4, %c0_5] : memref<128x32xf32, #tpu.memory_space<vmem>>, vector<128x32xf32>
    %cst = arith.constant dense<0.000000e+00> : vector<16x128xf32>
    %6 = tpu.matmul %4, %5, %cst {dimension_numbers = #tpu.dot_dimension_numbers<[1], [1], [0], [0], [0, 0, 1, 0], [], []>} : vector<16x32xf32>, vector<128x32xf32>, vector<16x128xf32> -> vector<16x128xf32>
    %7 = arith.addf %3, %6 : vector<16x128xf32>
    %c0_6 = arith.constant 0 : index
    %c0_7 = arith.constant 0 : index
    %8 = vector.load %arg7[%c0_6, %c0_7] : memref<16x128xf32, #tpu.memory_space<vmem>>, vector<16x128xf32>
    tpu.vector_store %arg7[%c0_6, %c0_7], %7 {strides = array<i32>} : memref<16x128xf32, #tpu.memory_space<vmem>>, vector<16x128xf32>,
    %c0_i32_8 = arith.constant 0 : i32
    %9 = arith.cmpi eq, %arg2, %c0_i32_8 : i32
    %10 = arith.extui %9 : i1 to i32
    %c0_i32_9 = arith.constant 0 : i32
    %11 = arith.cmpi ne, %10, %c0_i32_9 : i32
    scf.if %11 {
      %c0_10 = arith.constant 0 : index
      %c0_11 = arith.constant 0 : index
      %12 = vector.load %arg7[%c0_10, %c0_11] : memref<16x128xf32, #tpu.memory_space<vmem>>, vector<16x128xf32>
      %c0_12 = arith.constant 0 : index
      %c0_13 = arith.constant 0 : index
      %13 = vector.load %arg5[%c0_12, %c0_13] : memref<1x128xf32, #tpu.memory_space<vmem>>, vector<1x128xf32>
      %14 = vector.broadcast %13 : vector<1x128xf32> to vector<16x128xf32>
      %15 = arith.addf %12, %14 : vector<16x128xf32>
      %c0_14 = arith.constant 0 : index
      %c0_15 = arith.constant 0 : index
      %16 = vector.load %arg6[%c0_14, %c0_15] : memref<16x128xf32, #tpu.memory_space<vmem>>, vector<16x128xf32>
      tpu.vector_store %arg6[%c0_14, %c0_15], %15 {strides = array<i32>} : memref<16x128xf32, #tpu.memory_space<vmem>>, vector<16x128xf32>,
    } else {
    }
    return
  }
  func.func @transform_0(%arg0: i32, %arg1: i32, %arg2: i32) -> (i32, i32) {
    %c0_i32 = arith.constant 0 : i32
    return %arg0, %arg2 : i32, i32
  }
  func.func @transform_1(%arg0: i32, %arg1: i32, %arg2: i32) -> (i32, i32) {
    %c0_i32 = arith.constant 0 : i32
    return %arg1, %arg2 : i32, i32
  }
  func.func @transform_2(%arg0: i32, %arg1: i32, %arg2: i32) -> (i32, i32) {
    %c0_i32 = arith.constant 0 : i32
    %c0_i32_0 = arith.constant 0 : i32
    return %c0_i32, %arg1 : i32, i32
  }
  func.func @transform_3(%arg0: i32, %arg1: i32, %arg2: i32) -> (i32, i32) {
    %c0_i32 = arith.constant 0 : i32
    return %arg0, %arg1 : i32, i32
  }
}

</mosaic_0001>

<llo_original>
// kernel: pallas_linear.1
$region0: #{pallas_linear.1}
  #allocation0 [shape = 'u32[]', space=smem, size = 0x4, offset = 0x4, fixed_abs, tag = 'smem constant byte address 0x4 - core index']
  #allocation1 [shape = 'u32[144,128]{1,0:T(1,128)}', space=vmem, size = 0x12000, scoped, tag = 'internal scratch']
  #allocation2 [shape = 'f32[16,128]{1,0:T(8,128)}', space=vmem, size = 0x2000, scoped, tag = 'scratch operand']
  %s0 = inlined_call_operand.hbm [shape: f32[16,32], index: 0, kind: input, shape index: {}]
  %s1 = inlined_call_operand.hbm [shape: f32[128,32], index: 1, kind: input, shape index: {}]
  %s2 = inlined_call_operand.hbm [shape: f32[1,128], index: 2, kind: input, shape index: {}]
  %s3 = inlined_call_operand.hbm [shape: f32[16,128], index: 3, kind: output, shape index: {}]
  %s4 = sld [smem:[#allocation0]]
  $region42: #{pallas_linear.1} parent=0
    _
  %s6 = ssub.s32 1, %s4
  %s7 = scalar_select 0, %s6, %s4
  $region1: #{pallas_linear.1} parent=0
    #allocation3 [shape = 'u8[8192]{0}', space=vmem, size = 0x2000, scoped, tag = 'input window, operand 0, single buffered']
    #allocation4 [shape = 's32[1]{0}', space=sflag, size = 0x4, scoped, tag = 'scoped memory for pallas_linear.1']
    #allocation5 [shape = 's32[1]{0}', space=sflag, size = 0x4, scoped, tag = 'scoped memory for pallas_linear.1']
    #allocation6 [shape = 'u8[65536]{0}', space=vmem, size = 0x10000, scoped, tag = 'input window, operand 1, single buffered']
    #allocation7 [shape = 's32[1]{0}', space=sflag, size = 0x4, scoped, tag = 'scoped memory for pallas_linear.1']
    #allocation8 [shape = 'u8[512]{0}', space=vmem, size = 0x400, scoped, tag = 'input window, operand 2, single buffered']
    #allocation9 [shape = 'u8[8192]{0}', space=vmem, size = 0x2000, scoped, tag = 'output window, operand 0, single buffered']
    %8 = vsyncpa [#allocation4], 0
    %9 = vsyncpa [#allocation7], 0
    %10 = vsyncpa [#allocation5], 0
    // Predicated region
    $region2: #{pallas_linear.1} parent=1 // pred_check
      _
    $region3: #{pallas_linear.1} parent=1 // pred_check_branch
      %12 = sbr.rel (0) target = $region5
    $region4: #{pallas_linear.1} parent=1 // pred_region
      %s14 = ssub.s32 256, 256
      %15 = vsyncadd [#allocation4], %s14
      %s16 = sshll.u32 [#allocation3], 4
      %s17 = int_to_ptr.vmem [resolvable:$true] %s16
      %22 = dma.hbm_to_vmem [thread:$0]  %s0, 256, %s17, [#allocation4], 128, 128, 8
    $region5: #{pallas_linear.1} parent=1 // pred_fallthru
      _
    // Predicated region
    $region6: #{pallas_linear.1} parent=1 // pred_check
      _
    $region7: #{pallas_linear.1} parent=1 // pred_check_branch
      %24 = sbr.rel (0) target = $region9
    $region8: #{pallas_linear.1} parent=1 // pred_region
      %s26 = ssub.s32 2048, 2048
      %27 = vsyncadd [#allocation7], %s26
      %s28 = sshll.u32 [#allocation6], 4
      %s29 = int_to_ptr.vmem [resolvable:$true] %s28
      %34 = dma.hbm_to_vmem [thread:$0]  %s1, 2048, %s29, [#allocation7], 128, 128, 8
    $region9: #{pallas_linear.1} parent=1 // pred_fallthru
      _
    // Predicated region
    $region10: #{pallas_linear.1} parent=1 // pred_check
      _
    $region11: #{pallas_linear.1} parent=1 // pred_check_branch
      %36 = sbr.rel (0) target = $region13
    $region12: #{pallas_linear.1} parent=1 // pred_region
      %s38 = ssub.s32 16, 16
      %39 = vsyncadd [#allocation7], %s38
      %s41 = sshll.u32 [#allocation8], 4
      %s42 = int_to_ptr.vmem [resolvable:$true] %s41
      %44 = dma.hbm_to_vmem [thread:$0]  %s2, 16, %s42, [#allocation7]
    $region13: #{pallas_linear.1} parent=1 // pred_fallthru
      _
    // Predicated region
    $region14: #{pallas_linear.1} parent=1 // pred_check
      _
    $region15: #{pallas_linear.1} parent=1 // pred_check_branch
      %46 = sbr.rel (0) target = $region17
    $region16: #{pallas_linear.1} parent=1 // pred_region
      %47 = dma.done [#allocation4], 256
    $region17: #{pallas_linear.1} parent=1 // pred_fallthru
      _
    // Predicated region
    $region18: #{pallas_linear.1} parent=1 // pred_check
      _
    $region19: #{pallas_linear.1} parent=1 // pred_check_branch
      %49 = sbr.rel (0) target = $region21
    $region20: #{pallas_linear.1} parent=1 // pred_region
      %50 = dma.done [#allocation7], 2048
    $region21: #{pallas_linear.1} parent=1 // pred_fallthru
      _
    // Predicated region
    $region22: #{pallas_linear.1} parent=1 // pred_check
      _
    $region23: #{pallas_linear.1} parent=1 // pred_check_branch
      %52 = sbr.rel (0) target = $region25
    $region24: #{pallas_linear.1} parent=1 // pred_region
      %53 = dma.done [#allocation7], 16
    $region25: #{pallas_linear.1} parent=1 // pred_fallthru
      _
    %p54 = scmp.eq.s32.totalorder 0, 0
    // Predicated region
    $region26: #{pallas_linear.1} parent=1 // pred_check
      %p55 = pneg %p54
    $region27: #{pallas_linear.1} parent=1 // pred_check_branch
      %57 = sbr.rel (%p55) target = $region29
    $region28: #{pallas_linear.1} parent=1 // pred_region
      %58 = vst [vmem:[#allocation2] sm:$0xff] 0.0
      %59 = vst [vmem:[#allocation2 + $0x8] sm:$0xff] 0.0
    $region29: #{pallas_linear.1} parent=1 // pred_fallthru
      _
    %v60 = vld [vmem:[#allocation2] sm:$0xff]
    %v61 = vld [vmem:[#allocation2 + $0x8] sm:$0xff]
    %v62 = vld [vmem:[#allocation3] sm:$0xff]
    %v63 = vld [vmem:[#allocation3 + $0x8] sm:$0xff]
    %v64 = vld [vmem:[#allocation6] sm:$0xff]
    %v65 = vld [vmem:[#allocation6 + $0x8] sm:$0xff]
    %v66 = vld [vmem:[#allocation6 + $0x10] sm:$0xff]
    %v67 = vld [vmem:[#allocation6 + $0x18] sm:$0xff]
    %v68 = vld [vmem:[#allocation6 + $0x20] sm:$0xff]
    %v69 = vld [vmem:[#allocation6 + $0x28] sm:$0xff]
    %v70 = vld [vmem:[#allocation6 + $0x30] sm:$0xff]
    %v71 = vld [vmem:[#allocation6 + $0x38] sm:$0xff]
    %v72 = vld [vmem:[#allocation6 + $0x40] sm:$0xff]
    %v73 = vld [vmem:[#allocation6 + $0x48] sm:$0xff]
    %v74 = vld [vmem:[#allocation6 + $0x50] sm:$0xff]
    %v75 = vld [vmem:[#allocation6 + $0x58] sm:$0xff]
    %v76 = vld [vmem:[#allocation6 + $0x60] sm:$0xff]
    %v77 = vld [vmem:[#allocation6 + $0x68] sm:$0xff]
    %v78 = vld [vmem:[#allocation6 + $0x70] sm:$0xff]
    %v79 = vld [vmem:[#allocation6 + $0x78] sm:$0xff]
    %vm80 = vcmask 261120
    %v82 = vsel %vm80, %v62, 0
    %v85 = vsel %vm80, %v63, 0
    %v88 = vsel %vm80, %v64, 0
    %v91 = vsel %vm80, %v65, 0
    %v94 = vsel %vm80, %v66, 0
    %v97 = vsel %vm80, %v67, 0
    %v100 = vsel %vm80, %v68, 0
    %v103 = vsel %vm80, %v69, 0
    %v106 = vsel %vm80, %v70, 0
    %v109 = vsel %vm80, %v71, 0
    %v112 = vsel %vm80, %v72, 0
    %v115 = vsel %vm80, %v73, 0
    %v118 = vsel %vm80, %v74, 0
    %v121 = vsel %vm80, %v75, 0
    %v124 = vsel %vm80, %v76, 0
    %v127 = vsel %vm80, %v77, 0
    %v130 = vsel %vm80, %v78, 0
    %v133 = vsel %vm80, %v79, 0
    %135 = vmatprep.subr.mxu0 0.0
    %136 = vmatpush1.xpose.msra.mxu0 %v88
    %137 = vmatprep.subr.mxu0 0.0
    %138 = vmatpush1.xpose.msra.mxu0 %v91
    %139 = vmatprep.subr.mxu0 0.0
    %140 = vmatpush1.xpose.msra.mxu0 %v94
    %141 = vmatprep.subr.mxu0 0.0
    %142 = vmatpush1.xpose.msra.mxu0 %v97
    %143 = vmatprep.subr.mxu0 0.0
    %144 = vmatpush1.xpose.msra.mxu0 %v100
    %145 = vmatprep.subr.mxu0 0.0
    %146 = vmatpush1.xpose.msra.mxu0 %v103
    %147 = vmatprep.subr.mxu0 0.0
    %148 = vmatpush1.xpose.msra.mxu0 %v106
    %149 = vmatprep.subr.mxu0 0.0
    %150 = vmatpush1.xpose.msra.mxu0 %v109
    %151 = vmatprep.subr.mxu0 0.0
    %152 = vmatpush1.xpose.msra.mxu0 %v112
    %153 = vmatprep.subr.mxu0 0.0
    %154 = vmatpush1.xpose.msra.mxu0 %v115
    %155 = vmatprep.subr.mxu0 0.0
    %156 = vmatpush1.xpose.msra.mxu0 %v118
    %157 = vmatprep.subr.mxu0 0.0
    %158 = vmatpush1.xpose.msra.mxu0 %v121
    %159 = vmatprep.subr.mxu0 0.0
    %160 = vmatpush1.xpose.msra.mxu0 %v124
    %161 = vmatprep.subr.mxu0 0.0
    %162 = vmatpush1.xpose.msra.mxu0 %v127
    %163 = vmatprep.subr.mxu0 0.0
    %164 = vmatpush1.xpose.msra.mxu0 %v130
    %165 = vmatprep.subr.mxu0 0.0
    %166 = vmatpush1.xpose.msra.mxu0 %v133
    %167 = vmatprep.subr.mxu0 0.0
    %168 = vmatpush1.xpose.msra.mxu0 0.0
    %169 = vmatprep.subr.mxu0 0.0
    %170 = vmatpush1.xpose.msra.mxu0 0.0
    %171 = vmatprep.subr.mxu0 0.0
    %172 = vmatpush1.xpose.msra.mxu0 0.0
    %173 = vmatprep.subr.mxu0 0.0
    %174 = vmatpush1.xpose.msra.mxu0 0.0
    %175 = vmatprep.subr.mxu0 0.0
    %176 = vmatpush1.xpose.msra.mxu0 0.0
    %177 = vmatprep.subr.mxu0 0.0
    %178 = vmatpush1.xpose.msra.mxu0 0.0
    %179 = vmatprep.subr.mxu0 0.0
    %180 = vmatpush1.xpose.msra.mxu0 0.0
    %181 = vmatprep.subr.mxu0 0.0
    %182 = vmatpush1.xpose.msra.mxu0 0.0
    %183 = vmatprep.subr.mxu0 0.0
    %184 = vmatpush1.xpose.msra.mxu0 0.0
    %185 = vmatprep.subr.mxu0 0.0
    %186 = vmatpush1.xpose.msra.mxu0 0.0
    %187 = vmatprep.subr.mxu0 0.0
    %188 = vmatpush1.xpose.msra.mxu0 0.0
    %189 = vmatprep.subr.mxu0 0.0
    %190 = vmatpush1.xpose.msra.mxu0 0.0
    %191 = vmatprep.subr.mxu0 0.0
    %192 = vmatpush1.xpose.msra.mxu0 0.0
    %193 = vmatprep.subr.mxu0 0.0
    %194 = vmatpush1.xpose.msra.mxu0 0.0
    %195 = vmatprep.subr.mxu0 0.0
    %196 = vmatpush1.xpose.msra.mxu0 0.0
    %197 = vmatprep.subr.mxu0 0.0
    %198 = vmatpush1.xpose.msra.mxu0 0.0
    %199 = vmatprep.mubr.f32.mxu0 0.0
    %200 = vmatmul.mubr.f32.gmra.mrb[0].mxu0 %v82
    %v201 = vpop.f32.mrb[0].mxu0
    %v202 = vadd.f32 0.0, %v201
    %v203 = vpop.f32.mrb[0].mxu0
    %204 = vmatprep.mubr.f32.mxu0 0.0
    %205 = vmatmul.mubr.f32.gmra.mrb[0].mxu0 %v85
    %v206 = vpop.f32.mrb[0].mxu0
    %v207 = vadd.f32 0.0, %v206
    %v208 = vpop.f32.mrb[0].mxu0
    %209 = vdwg.mxu0
    %v210 = vadd.f32 %v60, %v202
    %v211 = vadd.f32 %v61, %v207
    %212 = vst [vmem:[#allocation2] sm:$0xff] %v210
    %213 = vst [vmem:[#allocation2 + $0x8] sm:$0xff] %v211
    // Predicated region
    $region30: #{pallas_linear.1} parent=1 // pred_check
      %p214 = pneg %p54
    $region31: #{pallas_linear.1} parent=1 // pred_check_branch
      %216 = sbr.rel (%p214) target = $region33
    $region32: #{pallas_linear.1} parent=1 // pred_region
      %v217 = vld [vmem:[#allocation2] sm:$0xff]
      %v218 = vld [vmem:[#allocation2 + $0x8] sm:$0xff]
      %v219 = vld [vmem:[#allocation8] sm:$0x1]
      %v221 = vlaneseq
      %v222 = vshrl.u32 %v221, 7
      %v223 = vsub.s32 0, %v222
      %v224 = vrot.slane %v219, %v223
      %v226 = vadd.f32 %v217, %v224
      %v227 = vadd.f32 %v218, %v224
      %228 = vst [vmem:[#allocation9] sm:$0xff] %v226
      %229 = vst [vmem:[#allocation9 + $0x8] sm:$0xff] %v227
    $region33: #{pallas_linear.1} parent=1 // pred_fallthru
      _
    // Predicated region
    $region34: #{pallas_linear.1} parent=1 // pred_check
      _
    $region35: #{pallas_linear.1} parent=1 // pred_check_branch
      %231 = sbr.rel (0) target = $region37
    $region36: #{pallas_linear.1} parent=1 // pred_region
      %s233 = ssub.s32 256, 256
      %234 = vsyncadd [#allocation5], %s233
      %s235 = sshll.u32 [#allocation9], 4
      %s236 = int_to_ptr.vmem [resolvable:$true] %s235
      %241 = dma.vmem_to_hbm [thread:$0]  %s236, 256, %s3, [#allocation5], 128, 128, 8
    $region37: #{pallas_linear.1} parent=1 // pred_fallthru
      _
    // Predicated region
    $region38: #{pallas_linear.1} parent=1 // pred_check
      _
    $region39: #{pallas_linear.1} parent=1 // pred_check_branch
      %243 = sbr.rel (0) target = $region41
    $region40: #{pallas_linear.1} parent=1 // pred_region
      %244 = dma.done [#allocation5], 256
    $region41: #{pallas_linear.1} parent=1 // pred_fallthru
      _
    %245 = vsyncpa [#allocation4], 1
    %246 = vsyncpa [#allocation7], 1
    %247 = vsyncpa [#allocation5], 1

</llo_original>
